<compile_context>
chip_gen: v7x
topology: tpu7x:2x2x1
jax: 0.10.0
libtpu: 0.0.40
codegen_flags: <defaults>
</compile_context>

<pallas_src>
import jax
import jax.numpy as jnp
from jax.experimental import pallas as pl
from jax.experimental.pallas import tpu as pltpu

LEAKY = 0.1
LANE = 128
VMEM_LIMIT = 32 * 1024 * 1024  # explicit scoped-VMEM budget, safe on v5e/v6e/v7x


def _rup(x, m):
    return ((x + m - 1) // m) * m


def _cpad(c):
    return max(LANE, _rup(c, LANE))


def _leaky(x):
    return jnp.where(x >= 0, x, LEAKY * x)


# ----------------------------------------------------------------------------- kernels

def _matmul_bias_act(x, w, b):
    """leaky_relu(x @ w + b).  x:(M,K) bf16, w:(K,Cout) bf16 (BN scale folded), b:(1,Cout) f32."""
    M, K = x.shape
    Cout = w.shape[1]
    TM = min(256, M)
    grid = (pl.cdiv(M, TM),)

    def kernel(x_ref, w_ref, b_ref, o_ref):
        y = jnp.dot(x_ref[...], w_ref[...], preferred_element_type=jnp.float32)
        y = _leaky(y + b_ref[...])
        o_ref[...] = y.astype(o_ref.dtype)

    cost = pl.CostEstimate(
        flops=2 * M * K * Cout, transcendentals=0,
        bytes_accessed=M * K * 2 + K * Cout * 2 + M * Cout * 2)

    return pl.pallas_call(
        kernel,
        out_shape=jax.ShapeDtypeStruct((M, Cout), jnp.bfloat16),
        grid=grid,
        in_specs=[
            pl.BlockSpec((TM, K), lambda i: (i, 0)),
            pl.BlockSpec((K, Cout), lambda i: (0, 0)),
            pl.BlockSpec((1, Cout), lambda i: (0, 0)),
        ],
        out_specs=pl.BlockSpec((TM, Cout), lambda i: (i, 0)),
        compiler_params=pltpu.CompilerParams(
            dimension_semantics=("parallel",), vmem_limit_bytes=VMEM_LIMIT),
        cost_estimate=cost,
    )(x, w, b)


def _fused_dw_pw(x_nhwc, dw_w, dw_b, pw_w, pw_b, stride):
    """Fused conv_dw block: depthwise 3x3 (+BN+leaky) -> pointwise 1x1 (+BN+leaky).

    x_nhwc:(N,H,W,C) bf16 (C lane-padded); dw_w:(9,1,C) f32 (BN scale folded);
    dw_b:(1,C) f32; pw_w:(C,Cout) bf16 (BN scale folded); pw_b:(1,Cout) f32.
    Returns (N,Ho,Wo,Cout) bf16.
    """
    N, H, W, C = x_nhwc.shape
    Cout = pw_w.shape[1]

    if stride == 1:
        Ho, Wo = H, W
        xin = jnp.pad(x_nhwc, ((0, 0), (1, 1), (1, 1), (0, 0)))          # (N,H+2,W+2,C)
    else:
        assert H % 2 == 0 and W % 2 == 0, "stride-2 blocks expect even spatial dims"
        Ho, Wo = H // 2, W // 2
        xp = jnp.pad(x_nhwc, ((0, 0), (1, 1), (1, 1), (0, 0)))           # (N,H+2,W+2,C)
        Wc = (W + 2) // 2
        # Column de-interleave (even/odd) so every stride-2 tap becomes a contiguous
        # in-kernel slice: xd[n,h,p,j,:] = xp[n,h,2j+p,:].
        xin = xp.reshape(N, H + 2, Wc, 2, C).transpose(0, 1, 3, 2, 4)    # (N,H+2,2,Wc,C)

    TR = min(8, Ho)                 # output rows per grid step
    while Ho % TR:
        TR -= 1
    n_rt = Ho // TR
    in_rows = (TR - 1) * stride + 3  # halo'd input rows needed per step
    if stride == 1:
        slab_shape = (in_rows, W + 2, C)
    else:
        slab_shape = (in_rows, 2, (W + 2) // 2, C)

    def kernel(x_hbm, dww_ref, dwb_ref, pww_ref, pwb_ref, o_ref, xslab, sem):
        n = pl.program_id(0)
        t = pl.program_id(1)
        r0 = t * (TR * stride)
        # Halo'd row slab: the padded input lives in HBM (pl.ANY); one rectangular DMA
        # per grid step brings exactly the rows this tile needs into VMEM.
        cp = pltpu.make_async_copy(x_hbm.at[n, pl.ds(r0, in_rows)], xslab, sem)
        cp.start()
        cp.wait()
        # TODO(synk): double-buffer this slab DMA across grid steps to overlap with compute.

        dww = dww_ref[...]           # (9,1,C) f32
        dwb = dwb_ref[...]           # (1,C)   f32
        pww = pww_ref[...]           # (C,Cout) bf16
        pwb = pwb_ref[...]           # (1,Cout) f32

        for rr in range(TR):         # static unroll (TR <= 8)
            acc = None
            for dy in range(3):
                for dx in range(3):
                    if stride == 1:
                        tap = xslab[rr + dy, dx:dx + Wo, :]
                    else:
                        tap = xslab[2 * rr + dy, dx % 2, (dx // 2):(dx // 2) + Wo, :]
                    term = tap.astype(jnp.float32) * dww[3 * dy + dx]
                    acc = term if acc is None else acc + term
            ydw = _leaky(acc + dwb)                                     # (Wo,C) f32
            z = jnp.dot(ydw.astype(jnp.bfloat16), pww,
                        preferred_element_type=jnp.float32)             # (Wo,Cout) f32
            z = _leaky(z + pwb)
            o_ref[0, rr] = z.astype(o_ref.dtype)

    cost = pl.CostEstimate(
        flops=N * Ho * Wo * (18 * C + 2 * C * Cout),
        transcendentals=0,
        bytes_accessed=xin.size * 2 + N * Ho * Wo * Cout * 2 + pw_w.size * 2)

    return pl.pallas_call(
        kernel,
        out_shape=jax.ShapeDtypeStruct((N, Ho, Wo, Cout), jnp.bfloat16),
        grid=(N, n_rt),
        in_specs=[
            pl.BlockSpec(memory_space=pl.ANY),                       # padded input, stays in HBM
            pl.BlockSpec((9, 1, C), lambda n, t: (0, 0, 0)),
            pl.BlockSpec((1, C), lambda n, t: (0, 0)),
            pl.BlockSpec((C, Cout), lambda n, t: (0, 0)),
            pl.BlockSpec((1, Cout), lambda n, t: (0, 0)),
        ],
        out_specs=pl.BlockSpec((1, TR, Wo, Cout), lambda n, t: (n, t, 0, 0)),
        scratch_shapes=[
            pltpu.VMEM(slab_shape, jnp.bfloat16),
            pltpu.SemaphoreType.DMA,
        ],
        compiler_params=pltpu.CompilerParams(
            dimension_semantics=("parallel", "parallel"),
            vmem_limit_bytes=VMEM_LIMIT),
        cost_estimate=cost,
    )(xin, dw_w, dw_b, pw_w, pw_b)


def _avgpool_fc(x, w, b):
    """AdaptiveAvgPool2d((1,1)) + Linear, fused.  x:(N,HW,C) bf16, w:(C,F) bf16, b:(1,F) f32."""
    N, HW, C = x.shape
    F = w.shape[1]

    def kernel(x_ref, w_ref, b_ref, o_ref):
        pooled = jnp.mean(x_ref[...].astype(jnp.float32), axis=1)       # (1,C)
        y = jnp.dot(pooled.astype(jnp.bfloat16), w_ref[...],
                    preferred_element_type=jnp.float32)
        o_ref[...] = y + b_ref[...]

    cost = pl.CostEstimate(flops=N * (HW * C + 2 * C * F), transcendentals=0,
                           bytes_accessed=N * HW * C * 2 + C * F * 2 + N * F * 4)

    return pl.pallas_call(
        kernel,
        out_shape=jax.ShapeDtypeStruct((N, F), jnp.float32),
        grid=(N,),
        in_specs=[
            pl.BlockSpec((1, HW, C), lambda n: (n, 0, 0)),
            pl.BlockSpec((C, F), lambda n: (0, 0)),
            pl.BlockSpec((1, F), lambda n: (0, 0)),
        ],
        out_specs=pl.BlockSpec((1, F), lambda n: (n, 0)),
        compiler_params=pltpu.CompilerParams(
            dimension_semantics=("parallel",), vmem_limit_bytes=VMEM_LIMIT),
        cost_estimate=cost,
    )(x, w, b)


# ----------------------------------------------------------------------------- glue

def _im2col_3x3_s2(x):
    """3x3, stride 2, pad 1 im2col on the tiny 3-channel input.  x:(N,H,W,Cin) f32."""
    N, H, W, Cin = x.shape
    Ho, Wo = H // 2, W // 2
    xp = jnp.pad(x, ((0, 0), (1, 1), (1, 1), (0, 0)))
    cols = []
    for dy in range(3):
        for dx in range(3):
            cols.append(xp[:, dy:dy + 2 * (Ho - 1) + 1:2, dx:dx + 2 * (Wo - 1) + 1:2, :])
    xcol = jnp.stack(cols, axis=3)                    # (N,Ho,Wo,9,Cin)
    return xcol.reshape(N * Ho * Wo, 9 * Cin), Ho, Wo


def _bn_fold(gamma, beta, mean, var, eps=1e-5):
    scale = gamma / jnp.sqrt(var + eps)
    return scale, beta - mean * scale


# conv_dw block configuration: (inp, oup, stride) — matches MobileNetV1.__init__
_DW_CFG = [
    (8, 16, 1), (16, 32, 2), (32, 32, 1), (32, 64, 2), (64, 64, 1),      # stage1[1:]
    (64, 128, 2), (128, 128, 1), (128, 128, 1), (128, 128, 1),
    (128, 128, 1), (128, 128, 1),                                        # stage2
    (128, 256, 2), (256, 256, 1),                                        # stage3
]


def init_params(key):
    keys = iter(jax.random.split(key, 200))
    nk = lambda: next(keys)
    conv_w = lambda shape, std=0.1: jax.random.normal(nk(), shape, jnp.float32) * std

    def bn(c):
        gamma = 1.0 + 0.1 * jax.random.normal(nk(), (c,), jnp.float32)
        beta = 0.1 * jax.random.normal(nk(), (c,), jnp.float32)
        mean = 0.1 * jax.random.normal(nk(), (c,), jnp.float32)
        var = jax.random.uniform(nk(), (c,), jnp.float32, minval=0.5, maxval=1.5)
        return _bn_fold(gamma, beta, mean, var)

    params = {}

    # conv0: conv_bn(3, 8, stride=2, leaky=0.1). BN scale folded into weights; Cout padded to 128.
    co_p = _cpad(8)
    w0 = conv_w((8, 3, 3, 3))                              # torch (Cout,Cin,3,3)
    s0, b0 = bn(8)
    w0 = w0 * s0[:, None, None, None]
    w_col = jnp.transpose(w0, (2, 3, 1, 0)).reshape(27, 8)  # K index = (dy*3+dx)*Cin + cin
    w_col = jnp.pad(w_col, ((0, 0), (0, co_p - 8)))
    params["conv0"] = dict(w=w_col.astype(jnp.bfloat16),
                           b=jnp.pad(b0, (0, co_p - 8)).reshape(1, co_p))

    blocks = []
    for inp, oup, stride in _DW_CFG:
        cin_p, cout_p = _cpad(inp), _cpad(oup)
        dw_w = conv_w((inp, 1, 3, 3))                      # depthwise (C,1,3,3)
        dw_s, dw_b = bn(inp)
        pw_w = conv_w((oup, inp, 1, 1))                    # pointwise (Cout,Cin,1,1)
        pw_s, pw_b = bn(oup)
        # depthwise: fold BN scale, tap-major layout (9,1,C_pad), zero-padded channels.
        dww = dw_w[:, 0] * dw_s[:, None, None]             # (inp,3,3)
        dww = jnp.transpose(dww, (1, 2, 0)).reshape(9, inp)
        dww = jnp.pad(dww, ((0, 0), (0, cin_p - inp))).reshape(9, 1, cin_p)
        dwb = jnp.pad(dw_b, (0, cin_p - inp)).reshape(1, cin_p)
        # pointwise: fold BN scale into output columns, (Cin_pad, Cout_pad) bf16.
        pww = (pw_w[:, :, 0, 0] * pw_s[:, None]).T         # (inp,oup)
        pww = jnp.pad(pww, ((0, cin_p - inp), (0, cout_p - oup)))
        pwb = jnp.pad(pw_b, (0, cout_p - oup)).reshape(1, cout_p)
        blocks.append(dict(stride=stride,
                           dw_w=dww, dw_b=dwb,
                           pw_w=pww.astype(jnp.bfloat16), pw_b=pwb))
    params["dw_blocks"] = blocks

    f_p = _rup(1000, LANE)                                 # 1024: lane-dense FC output
    fc_w = conv_w((1000, 256), std=0.05)                   # torch Linear weight (out,in)
    fc_b = 0.1 * jax.random.normal(nk(), (1000,), jnp.float32)
    params["fc_w"] = jnp.pad(fc_w.T, ((0, 0), (0, f_p - 1000))).astype(jnp.bfloat16)
    params["fc_b"] = jnp.pad(fc_b, (0, f_p - 1000)).reshape(1, f_p)
    return params


def mobilenet_v1_forward(x_nchw, params):
    # layout: NCHW (PyTorch) -> NHWC for the kernels
    x = jnp.transpose(x_nchw, (0, 2, 3, 1)).astype(jnp.float32)
    N = x.shape[0]

    # stage1[0]: full 3x3/s2 conv + BN + LeakyReLU(0.1): im2col + fused matmul kernel.
    xcol, Ho, Wo = _im2col_3x3_s2(x)
    p = params["conv0"]
    y = _matmul_bias_act(xcol.astype(jnp.bfloat16), p["w"], p["b"])
    x = y.reshape(N, Ho, Wo, p["w"].shape[1])

    # conv_dw blocks: one fused depthwise+pointwise kernel each (no intermediate HBM round trip).
    for blk in params["dw_blocks"]:
        x = _fused_dw_pw(x, blk["dw_w"], blk["dw_b"], blk["pw_w"], blk["pw_b"], blk["stride"])

    # AdaptiveAvgPool2d((1,1)) + view(-1,256) + Linear(256,1000) fused; slice off FC padding.
    N_, H, W, C = x.shape
    out = _avgpool_fc(x.reshape(N_, H * W, C), params["fc_w"], params["fc_b"])
    return out[:, :1000]


if __name__ == "__main__":
    key = jax.random.PRNGKey(0)
    k_in, k_par = jax.random.split(key)
    # Small NCHW input: 32x32 so the /32 downsampling chain ends at 1x1 like the real net.
    x = jax.random.normal(k_in, (2, 3, 32, 32), jnp.float32)
    params = init_params(k_par)

    out = jax.block_until_ready(mobilenet_v1_forward(x, params))
    assert out.shape == (2, 1000), out.shape
    assert bool(jnp.all(jnp.isfinite(out)))
    print("KERNEL_OK")
</pallas_src>

<mosaic_0001>
module attributes {stable_mosaic.version = 11 : i64} {
  func.func @kernel(%arg0: i32, %arg1: memref<256x27xbf16, #tpu.memory_space<vmem>>, %arg2: memref<27x128xbf16, #tpu.memory_space<vmem>>, %arg3: memref<1x128xf32, #tpu.memory_space<vmem>>, %arg4: memref<256x128xbf16, #tpu.memory_space<vmem>>) attributes {dimension_semantics = [#tpu.dimension_semantics<parallel>], iteration_bounds = array<i64: 2>, scalar_prefetch = 0 : i64, scratch_operands = 0 : i64, tpu.core_type = #tpu.core_type<tc>, window_params = [{transform_indices = @transform_0, window_bounds = array<i64: 256, 27>}, {pipeline_mode = #tpu.pipeline_mode<synchronous>, transform_indices = @transform_1, window_bounds = array<i64: 27, 128>}, {pipeline_mode = #tpu.pipeline_mode<synchronous>, transform_indices = @transform_2, window_bounds = array<i64: 1, 128>}, {transform_indices = @transform_3, window_bounds = array<i64: 256, 128>}]} {
    %c0 = arith.constant 0 : index
    %c0_0 = arith.constant 0 : index
    %0 = vector.load %arg1[%c0, %c0_0] : memref<256x27xbf16, #tpu.memory_space<vmem>>, vector<256x27xbf16>
    %c0_1 = arith.constant 0 : index
    %c0_2 = arith.constant 0 : index
    %1 = vector.load %arg2[%c0_1, %c0_2] : memref<27x128xbf16, #tpu.memory_space<vmem>>, vector<27x128xbf16>
    %cst = arith.constant dense<0.000000e+00> : vector<256x128xf32>
    %2 = tpu.matmul %0, %1, %cst {dimension_numbers = #tpu.dot_dimension_numbers<[1], [0], [0], [1], [0, 0, 1, 1], [], []>} : vector<256x27xbf16>, vector<27x128xbf16>, vector<256x128xf32> -> vector<256x128xf32>
    %c0_3 = arith.constant 0 : index
    %c0_4 = arith.constant 0 : index
    %3 = vector.load %arg3[%c0_3, %c0_4] : memref<1x128xf32, #tpu.memory_space<vmem>>, vector<1x128xf32>
    %4 = vector.broadcast %3 : vector<1x128xf32> to vector<256x128xf32>
    %5 = arith.addf %2, %4 : vector<256x128xf32>
    %cst_5 = arith.constant 0.000000e+00 : f32
    %6 = vector.broadcast %cst_5 : f32 to vector<256x128xf32>
    %7 = arith.cmpf oge, %5, %6 : vector<256x128xf32>
    %cst_6 = arith.constant 1.000000e-01 : f32
    %8 = vector.broadcast %cst_6 : f32 to vector<256x128xf32>
    %9 = arith.mulf %8, %5 : vector<256x128xf32>
    %10 = arith.select %7, %5, %9 : vector<256x128xi1>, vector<256x128xf32>
    %11 = arith.truncf %10 : vector<256x128xf32> to vector<256x128xbf16>
    %c0_7 = arith.constant 0 : index
    %c0_8 = arith.constant 0 : index
    %12 = vector.load %arg4[%c0_7, %c0_8] : memref<256x128xbf16, #tpu.memory_space<vmem>>, vector<256x128xbf16>
    tpu.vector_store %arg4[%c0_7, %c0_8], %11 {strides = array<i32>} : memref<256x128xbf16, #tpu.memory_space<vmem>>, vector<256x128xbf16>,
    return
  }
  func.func @transform_0(%arg0: i32) -> (i32, i32) {
    %c0_i32 = arith.constant 0 : i32
    %c0_i32_0 = arith.constant 0 : i32
    return %arg0, %c0_i32 : i32, i32
  }
  func.func @transform_1(%arg0: i32) -> (i32, i32) {
    %c0_i32 = arith.constant 0 : i32
    %c0_i32_0 = arith.constant 0 : i32
    %c0_i32_1 = arith.constant 0 : i32
    return %c0_i32, %c0_i32_0 : i32, i32
  }
  func.func @transform_2(%arg0: i32) -> (i32, i32) {
    %c0_i32 = arith.constant 0 : i32
    %c0_i32_0 = arith.constant 0 : i32
    %c0_i32_1 = arith.constant 0 : i32
    return %c0_i32, %c0_i32_0 : i32, i32
  }
  func.func @transform_3(%arg0: i32) -> (i32, i32) {
    %c0_i32 = arith.constant 0 : i32
    %c0_i32_0 = arith.constant 0 : i32
    return %arg0, %c0_i32 : i32, i32
  }
}

</mosaic_0001>

<llo_original>
// kernel: tpu_custom_call.1
$region0: #{tpu_custom_call.1}
  #allocation0 [shape = 'u32[]', space=smem, size = 0x4, offset = 0x4, fixed_abs, tag = 'smem constant byte address 0x4 - core index']
  #allocation1 [shape = 'u32[144,128]{1,0:T(1,128)}', space=vmem, size = 0x12000, scoped, tag = 'internal scratch']
  %s0 = inlined_call_operand.vmem [shape: bf16[512,27], index: 0, kind: input, shape index: {}]
  %s1 = inlined_call_operand.vmem [shape: bf16[27,128], index: 1, kind: input, shape index: {}]
  %s2 = inlined_call_operand.vmem [shape: f32[1,128], index: 2, kind: input, shape index: {}]
  %s3 = inlined_call_operand.hbm [shape: bf16[512,128], index: 3, kind: output, shape index: {}]
  %s4 = sld [smem:[#allocation0]]
  $region45: #{tpu_custom_call.1} parent=0
    _
  %s6 = ssub.s32 1, %s4
  %s7 = scalar_select 0, %s6, %s4
  $region1: #{tpu_custom_call.1} parent=0
    #allocation2 [shape = 'u8[131072]{0}', space=vmem, size = 0x20000, scoped, tag = 'output window, operand 0']
    #allocation3 [shape = 's32[2]{0}', space=sflag, size = 0x8, scoped, tag = 'scoped memory for tpu_custom_call.1']
    %8 = vsyncpa [#allocation3], 0
    %s9 = scalar_lea.sflag [#allocation3], 1
    %10 = vsyncpa %s9, 0
    loop: start=0, step=1, limit=4
    $region2: #{tpu_custom_call.1} parent=1 // loop_pre_header
      _
    $region3: #{tpu_custom_call.1} parent=1 // loop_header
      %s12 = sphi 0, %s16
      %p13 = scmp.ge.s32.totalorder %s12, 4
      %s22 = sphi 0, %s24
      %s25 = sphi 0, %s22
      %s26 = sphi 0, %s25
      %s42 = sphi 0, %s26
      %s46 = sphi 0, %s46
      %s48 = sphi 0, %s46
      %s49 = sphi 0, %s48
      %s63 = sphi 0, %s49
      %s67 = sphi 0, %s67
      %s69 = sphi 0, %s67
      %s70 = sphi 0, %s69
      %s84 = sphi 0, %s70
      %s90 = sphi 0, %s92
      %s93 = sphi 0, %s90
      %s94 = sphi 0, %s93
      %s110 = sphi 0, %s94
    $region4: #{tpu_custom_call.1} parent=1 // loop_header_branch
      %15 = sbr.rel (%p13) target = $region8
    $region5: #{tpu_custom_call.1} parent=1 // loop_body
      %s17 = ssub.s32 %s12, 1
      %s18 = ssub.s32 %s12, 2
      %s19 = sadd.s32 %s12, 1
      %s20 = ssub.s32 %s12, %s19
      %p21 = scmp.eq.s32.totalorder %s20, 0
      %s23 = sadd.s32 %s22, 1
      %s24 = scalar_select %p21, %s22, %s23
      %p27 = pneg %p21
      %p28 = scmp.eq.s32.totalorder %s12, 1
      %p29 = por %p27, %p28
      %p30 = scmp.ne.s32.totalorder %s22, %s25
      %p31 = scmp.eq.s32.totalorder %s12, 0
      %p32 = por %p30, %p31
      %p33 = scmp.ne.s32.totalorder %s22, %s25
      %p34 = scmp.eq.s32.totalorder %s17, 1
      %p35 = por %p33, %p34
      %p36 = scmp.ne.s32.totalorder %s25, %s26
      %p37 = scmp.eq.s32.totalorder %s17, 0
      %p38 = por %p36, %p37
      %p39 = scmp.ne.s32.totalorder %s25, %s26
      %p40 = scmp.eq.s32.totalorder %s18, 1
      %p41 = por %p39, %p40
      %p43 = scmp.ne.s32.totalorder %s26, %s42
      %p44 = scmp.eq.s32.totalorder %s18, 0
      %p45 = por %p43, %p44
      %s47 = sadd.s32 %s46, 1
      %p50 = scmp.eq.s32.totalorder %s12, 1
      %p51 = scmp.ne.s32.totalorder %s46, %s48
      %p52 = scmp.eq.s32.totalorder %s12, 0
      %p53 = por %p51, %p52
      %p54 = scmp.ne.s32.totalorder %s46, %s48
      %p55 = scmp.eq.s32.totalorder %s17, 1
      %p56 = por %p54, %p55
      %p57 = scmp.ne.s32.totalorder %s48, %s49
      %p58 = scmp.eq.s32.totalorder %s17, 0
      %p59 = por %p57, %p58
      %p60 = scmp.ne.s32.totalorder %s48, %s49
      %p61 = scmp.eq.s32.totalorder %s18, 1
      %p62 = por %p60, %p61
      %p64 = scmp.ne.s32.totalorder %s49, %s63
      %p65 = scmp.eq.s32.totalorder %s18, 0
      %p66 = por %p64, %p65
      %s68 = sadd.s32 %s67, 1
      %p71 = scmp.eq.s32.totalorder %s12, 1
      %p72 = scmp.ne.s32.totalorder %s67, %s69
      %p73 = scmp.eq.s32.totalorder %s12, 0
      %p74 = por %p72, %p73
      %p75 = scmp.ne.s32.totalorder %s67, %s69
      %p76 = scmp.eq.s32.totalorder %s17, 1
      %p77 = por %p75, %p76
      %p78 = scmp.ne.s32.totalorder %s69, %s70
      %p79 = scmp.eq.s32.totalorder %s17, 0
      %p80 = por %p78, %p79
      %p81 = scmp.ne.s32.totalorder %s69, %s70
      %p82 = scmp.eq.s32.totalorder %s18, 1
      %p83 = por %p81, %p82
      %p85 = scmp.ne.s32.totalorder %s70, %s84
      %p86 = scmp.eq.s32.totalorder %s18, 0
      %p87 = por %p85, %p86
      %s88 = ssub.s32 %s12, %s19
      %p89 = scmp.eq.s32.totalorder %s88, 0
      %s91 = sadd.s32 %s90, 1
      %s92 = scalar_select %p89, %s90, %s91
      %p95 = pneg %p89
      %p96 = scmp.eq.s32.totalorder %s12, 1
      %p97 = por %p95, %p96
      %p98 = scmp.ne.s32.totalorder %s90, %s93
      %p99 = scmp.eq.s32.totalorder %s12, 0
      %p100 = por %p98, %p99
      %p101 = scmp.ne.s32.totalorder %s90, %s93
      %p102 = scmp.eq.s32.totalorder %s17, 1
      %p103 = por %p101, %p102
      %p104 = scmp.ne.s32.totalorder %s93, %s94
      %p105 = scmp.eq.s32.totalorder %s17, 0
      %p106 = por %p104, %p105
      %p107 = scmp.ne.s32.totalorder %s93, %s94
      %p108 = scmp.eq.s32.totalorder %s18, 1
      %p109 = por %p107, %p108
      %p111 = scmp.ne.s32.totalorder %s94, %s110
      %p112 = scmp.eq.s32.totalorder %s18, 0
      %p113 = por %p111, %p112
      %p114 = scmp.le.s32.totalorder 1, %s12
      %p115 = scmp.lt.s32.totalorder %s12, 3
      %p116 = pnand %p114, %p115
      %p117 = pneg %p116
      // Predicated region
      $region9: #{tpu_custom_call.1} parent=5 // pred_check
        _
      $region10: #{tpu_custom_call.1} parent=5 // pred_check_branch
        %119 = sbr.rel (%p116) target = $region12
      $region11: #{tpu_custom_call.1} parent=5 // pred_region
        %s120 = ssub.s32 %s12, 1
        // Predicated region
        $region13: #{tpu_custom_call.1} parent=11 // pred_check
          %p121 = pneg %p59
        $region14: #{tpu_custom_call.1} parent=11 // pred_check_branch
          %123 = sbr.rel (%p121) target = $region16
        $region15: #{tpu_custom_call.1} parent=11 // pred_region
          _
        $region16: #{tpu_custom_call.1} parent=11 // pred_fallthru
          _
        // Predicated region
        $region17: #{tpu_custom_call.1} parent=11 // pred_check
          %p124 = pneg %p80
        $region18: #{tpu_custom_call.1} parent=11 // pred_check_branch
          %126 = sbr.rel (%p124) target = $region20
        $region19: #{tpu_custom_call.1} parent=11 // pred_region
          _
        $region20: #{tpu_custom_call.1} parent=11 // pred_fallthru
          _
      $region12: #{tpu_custom_call.1} parent=5 // pred_fallthru
        _
      %p127 = scmp.lt.s32.totalorder %s12, 2
      // Predicated region
      $region21: #{tpu_custom_call.1} parent=5 // pred_check
        %p128 = pneg %p127
      $region22: #{tpu_custom_call.1} parent=5 // pred_check_branch
        %130 = sbr.rel (%p128) target = $region24
      $region23: #{tpu_custom_call.1} parent=5 // pred_region
        // Predicated region
        $region25: #{tpu_custom_call.1} parent=23 // pred_check
          %p131 = pneg %p32
        $region26: #{tpu_custom_call.1} parent=23 // pred_check_branch
          %133 = sbr.rel (%p131) target = $region28
        $region27: #{tpu_custom_call.1} parent=23 // pred_region
          %s134 = smul.u32 32, %s12
          %p135 = scmp.lt.s32.totalorder %s134, 63
          %s136 = scalar_select %p135, %s134, 63
          %s137 = smul.addr %s136, 4
          %s138 = scalar_lea.vmem %s0, %s137
          %s139 = smul.u32 32, %s12
        $region28: #{tpu_custom_call.1} parent=23 // pred_fallthru
          _
      $region24: #{tpu_custom_call.1} parent=5 // pred_fallthru
        _
      %p140 = scmp.le.s32.totalorder 1, %s12
      %p141 = scmp.lt.s32.totalorder %s12, 3
      %p142 = pnand %p140, %p141
      %p143 = pneg %p142
      // Predicated region
      $region29: #{tpu_custom_call.1} parent=5 // pred_check
        _
      $region30: #{tpu_custom_call.1} parent=5 // pred_check_branch
        %145 = sbr.rel (%p142) target = $region32
      $region31: #{tpu_custom_call.1} parent=5 // pred_region
        %s146 = ssub.s32 %s12, 1
        %s147 = smul.u32 32, %s17
        %p148 = scmp.lt.s32.totalorder %s147, 63
        %s149 = scalar_select %p148, %s147, 63
        %s150 = smul.addr %s149, 4
        %s151 = scalar_lea.vmem %s0, %s150
        %p152 = pneg %p38
        %p153 = pneg %p35
        %p154 = pneg %p59
        %p155 = pneg %p56
        %p156 = pneg %p80
        %p157 = pneg %p77
        %p158 = pneg %p106
        %p159 = pneg %p103
        %s160 = sand.u32 %s93, 1
        %s161 = scalar_lea.sflag [#allocation3], %s160
        %s162 = sand.u32 %s93, 1
        %s163 = smul.addr %s162, 128
        %s164 = scalar_lea.vmem [#allocation2], %s163
        %s165 = smul.u32 32, %s17
        %p166 = scmp.lt.s32.totalorder %s165, 63
        %s167 = scalar_select %p166, %s165, 63
        %s168 = smul.addr %s167, 4
        %s169 = scalar_lea.vmem %s0, %s168
        %s170 = smul.u32 32, %s17
        %s171 = smul.u32 32, %s17
        %v173 = vld [vmem:[%s169] sm:$0xf]
        %v174 = vld [vmem:[%s169 + $0x4] sm:$0xf]
        %v175 = vld [vmem:[%s169 + $0x8] sm:$0xf]
        %v176 = vld [vmem:[%s169 + $0xc] sm:$0xf]
        %v177 = vld [vmem:[%s169 + $0x10] sm:$0xf]
        %v178 = vld [vmem:[%s169 + $0x14] sm:$0xf]
        %v179 = vld [vmem:[%s169 + $0x18] sm:$0xf]
        %v180 = vld [vmem:[%s169 + $0x1c] sm:$0xf]
        %v181 = vld [vmem:[%s169 + $0x20] sm:$0xf]
        %v182 = vld [vmem:[%s169 + $0x24] sm:$0xf]
        %v183 = vld [vmem:[%s169 + $0x28] sm:$0xf]
        %v184 = vld [vmem:[%s169 + $0x2c] sm:$0xf]
        %v185 = vld [vmem:[%s169 + $0x30] sm:$0xf]
        %v186 = vld [vmem:[%s169 + $0x34] sm:$0xf]
        %v187 = vld [vmem:[%s169 + $0x38] sm:$0xf]
        %v188 = vld [vmem:[%s169 + $0x3c] sm:$0xf]
        %v189 = vld [vmem:[%s169 + $0x40] sm:$0xf]
        %v190 = vld [vmem:[%s169 + $0x44] sm:$0xf]
        %v191 = vld [vmem:[%s169 + $0x48] sm:$0xf]
        %v192 = vld [vmem:[%s169 + $0x4c] sm:$0xf]
        %v193 = vld [vmem:[%s169 + $0x50] sm:$0xf]
        %v194 = vld [vmem:[%s169 + $0x54] sm:$0xf]
        %v195 = vld [vmem:[%s169 + $0x58] sm:$0xf]
        %v196 = vld [vmem:[%s169 + $0x5c] sm:$0xf]
        %v197 = vld [vmem:[%s169 + $0x60] sm:$0xf]
        %v198 = vld [vmem:[%s169 + $0x64] sm:$0xf]
        %v199 = vld [vmem:[%s169 + $0x68] sm:$0xf]
        %v200 = vld [vmem:[%s169 + $0x6c] sm:$0xf]
        %v201 = vld [vmem:[%s169 + $0x70] sm:$0xf]
        %v202 = vld [vmem:[%s169 + $0x74] sm:$0xf]
        %v203 = vld [vmem:[%s169 + $0x78] sm:$0xf]
        %v204 = vld [vmem:[%s169 + $0x7c] sm:$0xf]
        %v205 = vld [vmem:[%s1] sm:$0xf]
        %v206 = vld [vmem:[%s1 + $0x4] sm:$0xf]
        %v207 = vld [vmem:[%s1 + $0x8] sm:$0xf]
        %v208 = vld [vmem:[%s1 + $0xc] sm:$0x3]
        %v209 = vld [vmem:[%s2] sm:$0x1]
        %v211 = vlaneseq
        %v212 = vshrl.u32 %v211, 7
        %v213 = vsub.s32 0, %v212
        %v214 = vrot.slane %v209, %v213
        %v248 = vunpack.c.l.b16 %v173
        %v249 = vunpack.c.l.b16 %v174
        %v250 = vunpack.c.l.b16 %v175
        %v251 = vunpack.c.l.b16 %v176
        %v252 = vunpack.c.l.b16 %v177
        %v253 = vunpack.c.l.b16 %v178
        %v254 = vunpack.c.l.b16 %v179
        %v255 = vunpack.c.l.b16 %v180
        %v256 = vunpack.c.l.b16 %v181
        %v257 = vunpack.c.l.b16 %v182
        %v258 = vunpack.c.l.b16 %v183
        %v259 = vunpack.c.l.b16 %v184
        %v260 = vunpack.c.l.b16 %v185
        %v261 = vunpack.c.l.b16 %v186
        %v262 = vunpack.c.l.b16 %v187
        %v263 = vunpack.c.l.b16 %v188
        %v264 = vunpack.c.l.b16 %v189
        %v265 = vunpack.c.l.b16 %v190
        %v266 = vunpack.c.l.b16 %v191
        %v267 = vunpack.c.l.b16 %v192
        %v268 = vunpack.c.l.b16 %v193
        %v269 = vunpack.c.l.b16 %v194
        %v270 = vunpack.c.l.b16 %v195
        %v271 = vunpack.c.l.b16 %v196
        %v272 = vunpack.c.l.b16 %v197
        %v273 = vunpack.c.l.b16 %v198
        %v274 = vunpack.c.l.b16 %v199
        %v275 = vunpack.c.l.b16 %v200
        %v276 = vunpack.c.l.b16 %v201
        %v277 = vunpack.c.l.b16 %v202
        %v278 = vunpack.c.l.b16 %v203
        %v279 = vunpack.c.l.b16 %v204
        %v280 = vpack.c.b16 %v249, %v248
        %v281 = vpack.c.b16 %v251, %v250
        %v282 = vpack.c.b16 %v253, %v252
        %v283 = vpack.c.b16 %v255, %v254
        %v284 = vpack.c.b16 %v257, %v256
        %v285 = vpack.c.b16 %v259, %v258
        %v286 = vpack.c.b16 %v261, %v260
        %v287 = vpack.c.b16 %v263, %v262
        %v288 = vpack.c.b16 %v265, %v264
        %v289 = vpack.c.b16 %v267, %v266
        %v290 = vpack.c.b16 %v269, %v268
        %v291 = vpack.c.b16 %v271, %v270
        %v292 = vpack.c.b16 %v273, %v272
        %v293 = vpack.c.b16 %v275, %v274
        %v294 = vpack.c.b16 %v277, %v276
        %v295 = vpack.c.b16 %v279, %v278
        %v300 = vunpack.c.l.b16 %v205
        %v301 = vunpack.c.l.b16 %v206
        %v302 = vunpack.c.l.b16 %v207
        %v303 = vunpack.c.l.b16 %v208
        %v304 = vpack.c.b16 %v301, %v300
        %v305 = vpack.c.b16 %v303, %v302
        %vm307 = vcmask 220160
        %v309 = vsel %vm307, %v280, 0
        %v312 = vsel %vm307, %v281, 0
        %v315 = vsel %vm307, %v282, 0
        %v318 = vsel %vm307, %v283, 0
        %v321 = vsel %vm307, %v284, 0
        %v324 = vsel %vm307, %v285, 0
        %v327 = vsel %vm307, %v286, 0
        %v330 = vsel %vm307, %v287, 0
        %v333 = vsel %vm307, %v288, 0
        %v336 = vsel %vm307, %v289, 0
        %v339 = vsel %vm307, %v290, 0
        %v342 = vsel %vm307, %v291, 0
        %v345 = vsel %vm307, %v292, 0
        %v348 = vsel %vm307, %v293, 0
        %v351 = vsel %vm307, %v294, 0
        %v354 = vsel %vm307, %v295, 0
        %vm356 = vcmask 1044480
        %vm357 = vcmask 1045504
        %v358 = vsel %vm356, 4294967295, 65535
        %v359 = vsel %vm357, %v358, 0
        %v361 = vand.u32 %v305, %v359
        %363 = vmatprep.subr.bf16.mxu0 0
        %364 = vmatpush1.bf16.msra.mxu0 %v304
        %365 = vmatprep.subr.bf16.mxu0 0
        %366 = vmatpush1.bf16.msra.mxu0 %v361
        %367 = vmatprep.subr.bf16.mxu0 0
        %368 = vmatpush1.bf16.msra.mxu0 0
        %369 = vmatprep.subr.bf16.mxu0 0
        %370 = vmatpush1.bf16.msra.mxu0 0
        %371 = vmatprep.subr.bf16.mxu0 0
        %372 = vmatpush1.bf16.msra.mxu0 0
        %373 = vmatprep.subr.bf16.mxu0 0
        %374 = vmatpush1.bf16.msra.mxu0 0
        %375 = vmatprep.subr.bf16.mxu0 0
        %376 = vmatpush1.bf16.msra.mxu0 0
        %377 = vmatprep.subr.bf16.mxu0 0
        %378 = vmatpush1.bf16.msra.mxu0 0
        %379 = vmatprep.subr.bf16.mxu0 0
        %380 = vmatpush1.bf16.msra.mxu0 0
        %381 = vmatprep.subr.bf16.mxu0 0
        %382 = vmatpush1.bf16.msra.mxu0 0
        %383 = vmatprep.subr.bf16.mxu0 0
        %384 = vmatpush1.bf16.msra.mxu0 0
        %385 = vmatprep.subr.bf16.mxu0 0
        %386 = vmatpush1.bf16.msra.mxu0 0
        %387 = vmatprep.subr.bf16.mxu0 0
        %388 = vmatpush1.bf16.msra.mxu0 0
        %389 = vmatprep.subr.bf16.mxu0 0
        %390 = vmatpush1.bf16.msra.mxu0 0
        %391 = vmatprep.subr.bf16.mxu0 0
        %392 = vmatpush1.bf16.msra.mxu0 0
        %393 = vmatprep.subr.bf16.mxu0 0
        %394 = vmatpush1.bf16.msra.mxu0 0
        %395 = vmatprep.mubr.bf16.mxu0 0
        %396 = vmatmul.mubr.bf16.gmra.mrb[0].mxu0 %v309
        %v397 = vpop.f32.mrb[0].mxu0
        %v398 = vadd.f32 %v214, %v397
        %v399 = vpop.f32.mrb[0].mxu0
        %v400 = vpop.f32.mrb[0].mxu0
        %v401 = vadd.f32 %v214, %v400
        %v402 = vpop.f32.mrb[0].mxu0
        %403 = vmatprep.mubr.bf16.mxu0 0
        %404 = vmatmul.mubr.bf16.gmra.mrb[0].mxu0 %v312
        %v405 = vpop.f32.mrb[0].mxu0
        %v406 = vadd.f32 %v214, %v405
        %v407 = vpop.f32.mrb[0].mxu0
        %v408 = vpop.f32.mrb[0].mxu0
        %v409 = vadd.f32 %v214, %v408
        %v410 = vpop.f32.mrb[0].mxu0
        %411 = vmatprep.mubr.bf16.mxu0 0
        %412 = vmatmul.mubr.bf16.gmra.mrb[0].mxu0 %v315
        %v413 = vpop.f32.mrb[0].mxu0
        %v414 = vadd.f32 %v214, %v413
        %v415 = vpop.f32.mrb[0].mxu0
        %v416 = vpop.f32.mrb[0].mxu0
        %v417 = vadd.f32 %v214, %v416
        %v418 = vpop.f32.mrb[0].mxu0
        %419 = vmatprep.mubr.bf16.mxu0 0
        %420 = vmatmul.mubr.bf16.gmra.mrb[0].mxu0 %v318
        %v421 = vpop.f32.mrb[0].mxu0
        %v422 = vadd.f32 %v214, %v421
        %v423 = vpop.f32.mrb[0].mxu0
        %v424 = vpop.f32.mrb[0].mxu0
        %v425 = vadd.f32 %v214, %v424
        %v426 = vpop.f32.mrb[0].mxu0
        %427 = vmatprep.mubr.bf16.mxu0 0
        %428 = vmatmul.mubr.bf16.gmra.mrb[0].mxu0 %v321
        %v429 = vpop.f32.mrb[0].mxu0
        %v430 = vadd.f32 %v214, %v429
        %v431 = vpop.f32.mrb[0].mxu0
        %v432 = vpop.f32.mrb[0].mxu0
        %v433 = vadd.f32 %v214, %v432
        %v434 = vpop.f32.mrb[0].mxu0
        %435 = vmatprep.mubr.bf16.mxu0 0
        %436 = vmatmul.mubr.bf16.gmra.mrb[0].mxu0 %v324
        %v437 = vpop.f32.mrb[0].mxu0
        %v438 = vadd.f32 %v214, %v437
        %v439 = vpop.f32.mrb[0].mxu0
        %v440 = vpop.f32.mrb[0].mxu0
        %v441 = vadd.f32 %v214, %v440
        %v442 = vpop.f32.mrb[0].mxu0
        %443 = vmatprep.mubr.bf16.mxu0 0
        %444 = vmatmul.mubr.bf16.gmra.mrb[0].mxu0 %v327
        %v445 = vpop.f32.mrb[0].mxu0
        %v446 = vadd.f32 %v214, %v445
        %v447 = vpop.f32.mrb[0].mxu0
        %v448 = vpop.f32.mrb[0].mxu0
        %v449 = vadd.f32 %v214, %v448
        %v450 = vpop.f32.mrb[0].mxu0
        %451 = vmatprep.mubr.bf16.mxu0 0
        %452 = vmatmul.mubr.bf16.gmra.mrb[0].mxu0 %v330
        %v453 = vpop.f32.mrb[0].mxu0
        %v454 = vadd.f32 %v214, %v453
        %v455 = vpop.f32.mrb[0].mxu0
        %v456 = vpop.f32.mrb[0].mxu0
        %v457 = vadd.f32 %v214, %v456
        %v458 = vpop.f32.mrb[0].mxu0
        %459 = vmatprep.mubr.bf16.mxu0 0
        %460 = vmatmul.mubr.bf16.gmra.mrb[0].mxu0 %v333
        %v461 = vpop.f32.mrb[0].mxu0
        %v462 = vadd.f32 %v214, %v461
        %v463 = vpop.f32.mrb[0].mxu0
        %v464 = vpop.f32.mrb[0].mxu0
        %v465 = vadd.f32 %v214, %v464
        %v466 = vpop.f32.mrb[0].mxu0
        %467 = vmatprep.mubr.bf16.mxu0 0
        %468 = vmatmul.mubr.bf16.gmra.mrb[0].mxu0 %v336
        %v469 = vpop.f32.mrb[0].mxu0
        %v470 = vadd.f32 %v214, %v469
        %v471 = vpop.f32.mrb[0].mxu0
        %v472 = vpop.f32.mrb[0].mxu0
        %v473 = vadd.f32 %v214, %v472
        %v474 = vpop.f32.mrb[0].mxu0
        %475 = vmatprep.mubr.bf16.mxu0 0
        %476 = vmatmul.mubr.bf16.gmra.mrb[0].mxu0 %v339
        %v477 = vpop.f32.mrb[0].mxu0
        %v478 = vadd.f32 %v214, %v477
        %v479 = vpop.f32.mrb[0].mxu0
        %v480 = vpop.f32.mrb[0].mxu0
        %v481 = vadd.f32 %v214, %v480
        %v482 = vpop.f32.mrb[0].mxu0
        %483 = vmatprep.mubr.bf16.mxu0 0
        %484 = vmatmul.mubr.bf16.gmra.mrb[0].mxu0 %v342
        %v485 = vpop.f32.mrb[0].mxu0
        %v486 = vadd.f32 %v214, %v485
        %v487 = vpop.f32.mrb[0].mxu0
        %v488 = vpop.f32.mrb[0].mxu0
        %v489 = vadd.f32 %v214, %v488
        %v490 = vpop.f32.mrb[0].mxu0
        %491 = vmatprep.mubr.bf16.mxu0 0
        %492 = vmatmul.mubr.bf16.gmra.mrb[0].mxu0 %v345
        %v493 = vpop.f32.mrb[0].mxu0
        %v494 = vadd.f32 %v214, %v493
        %v495 = vpop.f32.mrb[0].mxu0
        %v496 = vpop.f32.mrb[0].mxu0
        %v497 = vadd.f32 %v214, %v496
        %v498 = vpop.f32.mrb[0].mxu0
        %499 = vmatprep.mubr.bf16.mxu0 0
        %500 = vmatmul.mubr.bf16.gmra.mrb[0].mxu0 %v348
        %v501 = vpop.f32.mrb[0].mxu0
        %v502 = vadd.f32 %v214, %v501
        %v503 = vpop.f32.mrb[0].mxu0
        %v504 = vpop.f32.mrb[0].mxu0
        %v505 = vadd.f32 %v214, %v504
        %v506 = vpop.f32.mrb[0].mxu0
        %507 = vmatprep.mubr.bf16.mxu0 0
        %508 = vmatmul.mubr.bf16.gmra.mrb[0].mxu0 %v351
        %v509 = vpop.f32.mrb[0].mxu0
        %v510 = vadd.f32 %v214, %v509
        %v511 = vpop.f32.mrb[0].mxu0
        %v512 = vpop.f32.mrb[0].mxu0
        %v513 = vadd.f32 %v214, %v512
        %v514 = vpop.f32.mrb[0].mxu0
        %515 = vmatprep.mubr.bf16.mxu0 0
        %516 = vmatmul.mubr.bf16.gmra.mrb[0].mxu0 %v354
        %v517 = vpop.f32.mrb[0].mxu0
        %v518 = vadd.f32 %v214, %v517
        %v519 = vpop.f32.mrb[0].mxu0
        %v520 = vpop.f32.mrb[0].mxu0
        %v521 = vadd.f32 %v214, %v520
        %v522 = vpop.f32.mrb[0].mxu0
        %523 = vdwg.mxu0
        %vm524 = vcmp.ge.f32.partialorder %v398, 0.0
        %vm525 = vcmp.ge.f32.partialorder %v401, 0.0
        %vm526 = vcmp.ge.f32.partialorder %v406, 0.0
        %vm527 = vcmp.ge.f32.partialorder %v409, 0.0
        %vm528 = vcmp.ge.f32.partialorder %v414, 0.0
        %vm529 = vcmp.ge.f32.partialorder %v417, 0.0
        %vm530 = vcmp.ge.f32.partialorder %v422, 0.0
        %vm531 = vcmp.ge.f32.partialorder %v425, 0.0
        %vm532 = vcmp.ge.f32.partialorder %v430, 0.0
        %vm533 = vcmp.ge.f32.partialorder %v433, 0.0
        %vm534 = vcmp.ge.f32.partialorder %v438, 0.0
        %vm535 = vcmp.ge.f32.partialorder %v441, 0.0
        %vm536 = vcmp.ge.f32.partialorder %v446, 0.0
        %vm537 = vcmp.ge.f32.partialorder %v449, 0.0
        %vm538 = vcmp.ge.f32.partialorder %v454, 0.0
        %vm539 = vcmp.ge.f32.partialorder %v457, 0.0
        %vm540 = vcmp.ge.f32.partialorder %v462, 0.0
        %vm541 = vcmp.ge.f32.partialorder %v465, 0.0
        %vm542 = vcmp.ge.f32.partialorder %v470, 0.0
        %vm543 = vcmp.ge.f32.partialorder %v473, 0.0
        %vm544 = vcmp.ge.f32.partialorder %v478, 0.0
        %vm545 = vcmp.ge.f32.partialorder %v481, 0.0
        %vm546 = vcmp.ge.f32.partialorder %v486, 0.0
        %vm547 = vcmp.ge.f32.partialorder %v489, 0.0
        %vm548 = vcmp.ge.f32.partialorder %v494, 0.0
        %vm549 = vcmp.ge.f32.partialorder %v497, 0.0
        %vm550 = vcmp.ge.f32.partialorder %v502, 0.0
        %vm551 = vcmp.ge.f32.partialorder %v505, 0.0
        %vm552 = vcmp.ge.f32.partialorder %v510, 0.0
        %vm553 = vcmp.ge.f32.partialorder %v513, 0.0
        %vm554 = vcmp.ge.f32.partialorder %v518, 0.0
        %vm555 = vcmp.ge.f32.partialorder %v521, 0.0
        %v556 = vmul.f32 %v398, 0.1
        %v557 = vmul.f32 %v401, 0.1
        %v558 = vmul.f32 %v406, 0.1
        %v559 = vmul.f32 %v409, 0.1
        %v560 = vmul.f32 %v414, 0.1
        %v561 = vmul.f32 %v417, 0.1
        %v562 = vmul.f32 %v422, 0.1
        %v563 = vmul.f32 %v425, 0.1
        %v564 = vmul.f32 %v430, 0.1
        %v565 = vmul.f32 %v433, 0.1
        %v566 = vmul.f32 %v438, 0.1
        %v567 = vmul.f32 %v441, 0.1
        %v568 = vmul.f32 %v446, 0.1
        %v569 = vmul.f32 %v449, 0.1
        %v570 = vmul.f32 %v454, 0.1
        %v571 = vmul.f32 %v457, 0.1
        %v572 = vmul.f32 %v462, 0.1
        %v573 = vmul.f32 %v465, 0.1
        %v574 = vmul.f32 %v470, 0.1
        %v575 = vmul.f32 %v473, 0.1
        %v576 = vmul.f32 %v478, 0.1
        %v577 = vmul.f32 %v481, 0.1
        %v578 = vmul.f32 %v486, 0.1
        %v579 = vmul.f32 %v489, 0.1
        %v580 = vmul.f32 %v494, 0.1
        %v581 = vmul.f32 %v497, 0.1
        %v582 = vmul.f32 %v502, 0.1
        %v583 = vmul.f32 %v505, 0.1
        %v584 = vmul.f32 %v510, 0.1
        %v585 = vmul.f32 %v513, 0.1
        %v586 = vmul.f32 %v518, 0.1
        %v587 = vmul.f32 %v521, 0.1
        %v588 = vsel %vm524, %v398, %v556
        %v589 = vsel %vm525, %v401, %v557
        %v590 = vsel %vm526, %v406, %v558
        %v591 = vsel %vm527, %v409, %v559
        %v592 = vsel %vm528, %v414, %v560
        %v593 = vsel %vm529, %v417, %v561
        %v594 = vsel %vm530, %v422, %v562
        %v595 = vsel %vm531, %v425, %v563
        %v596 = vsel %vm532, %v430, %v564
        %v597 = vsel %vm533, %v433, %v565
        %v598 = vsel %vm534, %v438, %v566
        %v599 = vsel %vm535, %v441, %v567
        %v600 = vsel %vm536, %v446, %v568
        %v601 = vsel %vm537, %v449, %v569
        %v602 = vsel %vm538, %v454, %v570
        %v603 = vsel %vm539, %v457, %v571
        %v604 = vsel %vm540, %v462, %v572
        %v605 = vsel %vm541, %v465, %v573
        %v606 = vsel %vm542, %v470, %v574
        %v607 = vsel %vm543, %v473, %v575
        %v608 = vsel %vm544, %v478, %v576
        %v609 = vsel %vm545, %v481, %v577
        %v610 = vsel %vm546, %v486, %v578
        %v611 = vsel %vm547, %v489, %v579
        %v612 = vsel %vm548, %v494, %v580
        %v613 = vsel %vm549, %v497, %v581
        %v614 = vsel %vm550, %v502, %v582
        %v615 = vsel %vm551, %v505, %v583
        %v616 = vsel %vm552, %v510, %v584
        %v617 = vsel %vm553, %v513, %v585
        %v618 = vsel %vm554, %v518, %v586
        %v619 = vsel %vm555, %v521, %v587
        %v620 = vpack.c.bf16 %v589, %v588
        %v621 = vpack.c.bf16 %v591, %v590
        %v622 = vpack.c.bf16 %v593, %v592
        %v623 = vpack.c.bf16 %v595, %v594
        %v624 = vpack.c.bf16 %v597, %v596
        %v625 = vpack.c.bf16 %v599, %v598
        %v626 = vpack.c.bf16 %v601, %v600
        %v627 = vpack.c.bf16 %v603, %v602
        %v628 = vpack.c.bf16 %v605, %v604
        %v629 = vpack.c.bf16 %v607, %v606
        %v630 = vpack.c.bf16 %v609, %v608
        %v631 = vpack.c.bf16 %v611, %v610
        %v632 = vpack.c.bf16 %v613, %v612
        %v633 = vpack.c.bf16 %v615, %v614
        %v634 = vpack.c.bf16 %v617, %v616
        %v635 = vpack.c.bf16 %v619, %v618
        %v652 = vunpack.c.l.b16 %v620
        %v653 = vunpack.c.h.b16 %v620
        %v654 = vunpack.c.l.b16 %v621
        %v655 = vunpack.c.h.b16 %v621
        %v656 = vunpack.c.l.b16 %v622
        %v657 = vunpack.c.h.b16 %v622
        %v658 = vunpack.c.l.b16 %v623
        %v659 = vunpack.c.h.b16 %v623
        %v660 = vunpack.c.l.b16 %v624
        %v661 = vunpack.c.h.b16 %v624
        %v662 = vunpack.c.l.b16 %v625
        %v663 = vunpack.c.h.b16 %v625
        %v664 = vunpack.c.l.b16 %v626
        %v665 = vunpack.c.h.b16 %v626
        %v666 = vunpack.c.l.b16 %v627
        %v667 = vunpack.c.h.b16 %v627
        %v668 = vunpack.c.l.b16 %v628
        %v669 = vunpack.c.h.b16 %v628
        %v670 = vunpack.c.l.b16 %v629
        %v671 = vunpack.c.h.b16 %v629
        %v672 = vunpack.c.l.b16 %v630
        %v673 = vunpack.c.h.b16 %v630
        %v674 = vunpack.c.l.b16 %v631
        %v675 = vunpack.c.h.b16 %v631
        %v676 = vunpack.c.l.b16 %v632
        %v677 = vunpack.c.h.b16 %v632
        %v678 = vunpack.c.l.b16 %v633
        %v679 = vunpack.c.h.b16 %v633
        %v680 = vunpack.c.l.b16 %v634
        %v681 = vunpack.c.h.b16 %v634
        %v682 = vunpack.c.l.b16 %v635
        %v683 = vunpack.c.h.b16 %v635
        %v684 = vpack.c.b16 %v652, %v652
        %v685 = vpack.c.b16 %v653, %v653
        %v686 = vpack.c.b16 %v654, %v654
        %v687 = vpack.c.b16 %v655, %v655
        %v688 = vpack.c.b16 %v656, %v656
        %v689 = vpack.c.b16 %v657, %v657
        %v690 = vpack.c.b16 %v658, %v658
        %v691 = vpack.c.b16 %v659, %v659
        %v692 = vpack.c.b16 %v660, %v660
        %v693 = vpack.c.b16 %v661, %v661
        %v694 = vpack.c.b16 %v662, %v662
        %v695 = vpack.c.b16 %v663, %v663
        %v696 = vpack.c.b16 %v664, %v664
        %v697 = vpack.c.b16 %v665, %v665
        %v698 = vpack.c.b16 %v666, %v666
        %v699 = vpack.c.b16 %v667, %v667
        %v700 = vpack.c.b16 %v668, %v668
        %v701 = vpack.c.b16 %v669, %v669
        %v702 = vpack.c.b16 %v670, %v670
        %v703 = vpack.c.b16 %v671, %v671
        %v704 = vpack.c.b16 %v672, %v672
        %v705 = vpack.c.b16 %v673, %v673
        %v706 = vpack.c.b16 %v674, %v674
        %v707 = vpack.c.b16 %v675, %v675
        %v708 = vpack.c.b16 %v676, %v676
        %v709 = vpack.c.b16 %v677, %v677
        %v710 = vpack.c.b16 %v678, %v678
        %v711 = vpack.c.b16 %v679, %v679
        %v712 = vpack.c.b16 %v680, %v680
        %v713 = vpack.c.b16 %v681, %v681
        %v714 = vpack.c.b16 %v682, %v682
        %v715 = vpack.c.b16 %v683, %v683
        %748 = vst [vmem:[%s164] sm:$0xf] %v684
        %749 = vst [vmem:[%s164 + $0x4] sm:$0xf] %v685
        %750 = vst [vmem:[%s164 + $0x8] sm:$0xf] %v686
        %751 = vst [vmem:[%s164 + $0xc] sm:$0xf] %v687
        %752 = vst [vmem:[%s164 + $0x10] sm:$0xf] %v688
        %753 = vst [vmem:[%s164 + $0x14] sm:$0xf] %v689
        %754 = vst [vmem:[%s164 + $0x18] sm:$0xf] %v690
        %755 = vst [vmem:[%s164 + $0x1c] sm:$0xf] %v691
        %756 = vst [vmem:[%s164 + $0x20] sm:$0xf] %v692
        %757 = vst [vmem:[%s164 + $0x24] sm:$0xf] %v693
        %758 = vst [vmem:[%s164 + $0x28] sm:$0xf] %v694
        %759 = vst [vmem:[%s164 + $0x2c] sm:$0xf] %v695
        %760 = vst [vmem:[%s164 + $0x30] sm:$0xf] %v696
        %761 = vst [vmem:[%s164 + $0x34] sm:$0xf] %v697
        %762 = vst [vmem:[%s164 + $0x38] sm:$0xf] %v698
        %763 = vst [vmem:[%s164 + $0x3c] sm:$0xf] %v699
        %764 = vst [vmem:[%s164 + $0x40] sm:$0xf] %v700
        %765 = vst [vmem:[%s164 + $0x44] sm:$0xf] %v701
        %766 = vst [vmem:[%s164 + $0x48] sm:$0xf] %v702
        %767 = vst [vmem:[%s164 + $0x4c] sm:$0xf] %v703
        %768 = vst [vmem:[%s164 + $0x50] sm:$0xf] %v704
        %769 = vst [vmem:[%s164 + $0x54] sm:$0xf] %v705
        %770 = vst [vmem:[%s164 + $0x58] sm:$0xf] %v706
        %771 = vst [vmem:[%s164 + $0x5c] sm:$0xf] %v707
        %772 = vst [vmem:[%s164 + $0x60] sm:$0xf] %v708
        %773 = vst [vmem:[%s164 + $0x64] sm:$0xf] %v709
        %774 = vst [vmem:[%s164 + $0x68] sm:$0xf] %v710
        %775 = vst [vmem:[%s164 + $0x6c] sm:$0xf] %v711
        %776 = vst [vmem:[%s164 + $0x70] sm:$0xf] %v712
        %777 = vst [vmem:[%s164 + $0x74] sm:$0xf] %v713
        %778 = vst [vmem:[%s164 + $0x78] sm:$0xf] %v714
        %779 = vst [vmem:[%s164 + $0x7c] sm:$0xf] %v715
        %s780 = sand.u32 %s93, 1
        %s781 = scalar_lea.sflag [#allocation3], %s780
        %s782 = sand.u32 %s93, 1
        %s783 = smul.addr %s782, 128
        %s784 = scalar_lea.vmem [#allocation2], %s783
        // Predicated region
        $region33: #{tpu_custom_call.1} parent=31 // pred_check
          %p785 = pneg %p103
        $region34: #{tpu_custom_call.1} parent=31 // pred_check_branch
          %787 = sbr.rel (%p785) target = $region36
        $region35: #{tpu_custom_call.1} parent=31 // pred_region
          %s788 = smul.u32 32, %s17
          %s790 = ssub.s32 2048, 2048
          %791 = vsyncadd %s781, %s790
          %s792 = smul.addr %s788, 64
          %s793 = scalar_lea.hbm %s3, %s792
          %s794 = sshll.u32 %s784, 4
          %s795 = int_to_ptr.vmem [resolvable:$true] %s794
          %800 = dma.vmem_to_hbm [thread:$0]  %s795, 2048, %s793, %s781, 64, 64, 4
        $region36: #{tpu_custom_call.1} parent=31 // pred_fallthru
          _
      $region32: #{tpu_custom_call.1} parent=5 // pred_fallthru
        _
      %p801 = scmp.le.s32.totalorder 2, %s12
      // Predicated region
      $region37: #{tpu_custom_call.1} parent=5 // pred_check
        %p802 = pneg %p801
      $region38: #{tpu_custom_call.1} parent=5 // pred_check_branch
        %804 = sbr.rel (%p802) target = $region40
      $region39: #{tpu_custom_call.1} parent=5 // pred_region
        %s805 = ssub.s32 %s12, 2
        // Predicated region
        $region41: #{tpu_custom_call.1} parent=39 // pred_check
          %p806 = pneg %p109
        $region42: #{tpu_custom_call.1} parent=39 // pred_check_branch
          %808 = sbr.rel (%p806) target = $region44
        $region43: #{tpu_custom_call.1} parent=39 // pred_region
          %s809 = sand.u32 %s94, 1
          %s810 = scalar_lea.sflag [#allocation3], %s809
          %s811 = sand.u32 %s94, 1
          %s812 = smul.addr %s811, 128
          %s813 = scalar_lea.vmem [#allocation2], %s812
          %814 = dma.done %s810, 2048
        $region44: #{tpu_custom_call.1} parent=39 // pred_fallthru
          _
      $region40: #{tpu_custom_call.1} parent=5 // pred_fallthru
        _
    $region6: #{tpu_custom_call.1} parent=1 // loop_footer
      %s16 = sadd.s32 1, %s12
    $region7: #{tpu_custom_call.1} parent=1 // loop_footer_branch
      %11 = sbr.rel target = $region3
    $region8: #{tpu_custom_call.1} parent=1 // loop_exit
      _
    %815 = vsyncpa [#allocation3], 1
    %s816 = scalar_lea.sflag [#allocation3], 1
    %817 = vsyncpa %s816, 1

</llo_original>
